<compile_context>
chip_gen: v7x
topology: tpu7x:2x2x1
jax: 0.10.0
libtpu: 0.0.40
codegen_flags: <defaults>
</compile_context>

<pallas_src>
import functools

import jax
import jax.numpy as jnp
from jax.experimental import pallas as pl
from jax.experimental.pallas import tpu as pltpu

_SUBLANE = 8   # batch-tile rows are a multiple of this
_LANE = 128    # hidden feature dim of the resident weights is padded to this
_TM_MAX = 4096  # max batch-tile rows (comfortably inside scoped VMEM on all gens)


def _round_up(x, m):
    return ((x + m - 1) // m) * m


def _cdiv(a, b):
    return (a + b - 1) // b


def _mlp_kernel(x_ref, w1_ref, b1_ref, w2_ref, b2_ref, w3_ref, b3_ref, out_ref):
    """Fused 3-layer MLP on one (TM, d_in) batch tile.

    x is compact (TM, d_in); the MXU zero-extends the small K internally.  The hidden
    dim is lane-padded (exact zero padding) so the two hidden matmuls are full-width.
    Accumulation, bias adds and ReLU stay in f32 (weights/activations may be bf16).
    The output store is compact (TM, d_out) — only real bytes go back to HBM.
    """
    x = x_ref[...]
    h1 = jnp.dot(x, w1_ref[...], preferred_element_type=jnp.float32) + b1_ref[...]
    h1 = jnp.maximum(h1, 0.0)
    h2 = jnp.dot(h1.astype(w2_ref.dtype), w2_ref[...],
                 preferred_element_type=jnp.float32) + b2_ref[...]
    h2 = jnp.maximum(h2, 0.0)
    out_ref[...] = (jnp.dot(h2.astype(w3_ref.dtype), w3_ref[...],
                            preferred_element_type=jnp.float32)
                    + b3_ref[...]).astype(out_ref.dtype)


def _pad2d(a, rows, cols):
    a = a.astype(jnp.float32)
    return jnp.pad(a, ((0, rows - a.shape[0]), (0, cols - a.shape[1])))


@functools.partial(
    jax.jit,
    static_argnames=("sequence_length", "x_dimension", "z_dimension", "compute_dtype"),
)
def decoder_mean_forward(z, params, *, sequence_length, x_dimension,
                         z_dimension=1, compute_dtype=jnp.float32):
    """z: (B, sequence_length, z_dimension=1) -> mu_x: (B, sequence_length, x_dimension).

    compute_dtype: jnp.float32 (default, exact; best on v5e) or jnp.bfloat16
    (v6e/v7x fast path — halves activation/weight HBM bytes; MXU still accumulates
    in f32, bias/ReLU in f32).
    """
    assert z.ndim == 3 and z.shape[-1] == z_dimension == 1
    B = z.shape[0]
    d_in = sequence_length * z_dimension
    d_out = sequence_length * x_dimension
    w1, b1, w2, b2, w3, b3 = params
    H = w1.shape[1]
    h_p = _round_up(H, _LANE)   # only the resident weights' hidden dim is lane-padded

    # --- batch-adaptive tiling -------------------------------------------------------
    n_tiles = _cdiv(B, _TM_MAX)
    if n_tiles > 1 and n_tiles % 2 == 1:
        n_tiles += 1            # even grid length -> balanced across v7x's 2 TCs
    TM = _round_up(_cdiv(B, n_tiles), _SUBLANE)
    B_p = n_tiles * TM          # <= 7 wasted rows per tile

    # compact activations: cast first, pad only the batch rows (no lane padding)
    x2d = z.reshape(B, d_in).astype(compute_dtype)
    x2d = jnp.pad(x2d, ((0, B_p - B), (0, 0)))

    # weights: hidden dim zero-padded to lane width (exact), input/output dims compact
    w1p = _pad2d(w1, d_in, h_p).astype(compute_dtype)    # (d_in, h_p)
    w2p = _pad2d(w2, h_p, h_p).astype(compute_dtype)     # (h_p,  h_p)
    w3p = _pad2d(w3, h_p, d_out).astype(compute_dtype)   # (h_p,  d_out)
    b1p = _pad2d(b1, 1, h_p)     # biases stay f32 (added to f32 accumulators)
    b2p = _pad2d(b2, 1, h_p)
    b3p = _pad2d(b3, 1, d_out)

    grid = (n_tiles,)

    # --- honest cost hint (compact I/O sizes) ----------------------------------------
    flops = 2 * B_p * (d_in * h_p + h_p * h_p + h_p * d_out)
    bytes_accessed = sum(
        a.size * a.dtype.itemsize
        for a in (x2d, w1p, b1p, w2p, b2p, w3p, b3p)
    ) + B_p * d_out * 4
    cost = pl.CostEstimate(flops=flops, transcendentals=0, bytes_accessed=bytes_accessed)

    out = pl.pallas_call(
        _mlp_kernel,
        out_shape=jax.ShapeDtypeStruct((B_p, d_out), jnp.float32),
        grid=grid,
        in_specs=[
            # activations: compact last dim (== full array dim), tiled along batch,
            # double-buffered by the pipeline
            pl.BlockSpec((TM, d_in), lambda i: (i, 0)),
            # weights / biases: resident across all grid steps (index -> (0, 0))
            pl.BlockSpec((d_in, h_p), lambda i: (0, 0)),
            pl.BlockSpec((1, h_p), lambda i: (0, 0)),
            pl.BlockSpec((h_p, h_p), lambda i: (0, 0)),
            pl.BlockSpec((1, h_p), lambda i: (0, 0)),
            pl.BlockSpec((h_p, d_out), lambda i: (0, 0)),
            pl.BlockSpec((1, d_out), lambda i: (0, 0)),
        ],
        # compact output block: only real bytes written back to HBM
        out_specs=pl.BlockSpec((TM, d_out), lambda i: (i, 0)),
        compiler_params=pltpu.CompilerParams(
            # batch tiles are independent -> shard across v7x's 2 TensorCores
            dimension_semantics=("parallel",),
        ),
        cost_estimate=cost,
    )(x2d, w1p, b1p, w2p, b2p, w3p, b3p)

    # slice off batch padding only (no lane padding anymore), restore (B, S, x_dim)
    return out[:B].reshape(B, sequence_length, x_dimension)


def init_params(key, sequence_length, x_dimension, z_dimension, inter_dim):
    """Deterministic init mimicking torch.nn.Linear default U(-1/sqrt(fan_in), +1/sqrt(fan_in)).
    Weights stored as [in_features, out_features] so the kernel computes x @ W + b
    (equivalent to PyTorch's x @ W_torch.T + b)."""
    dims = [
        (sequence_length * z_dimension, inter_dim),
        (inter_dim, inter_dim),
        (inter_dim, sequence_length * x_dimension),
    ]
    params = []
    for (fan_in, fan_out) in dims:
        key, kw, kb = jax.random.split(key, 3)
        bound = 1.0 / jnp.sqrt(float(fan_in))
        w = jax.random.uniform(kw, (fan_in, fan_out), jnp.float32, -bound, bound)
        b = jax.random.uniform(kb, (1, fan_out), jnp.float32, -bound, bound)
        params += [w, b]
    return tuple(params)


def _reference_forward(z, params, sequence_length, x_dimension):
    # Pure-JAX reference for correctness checking.
    w1, b1, w2, b2, w3, b3 = params
    x = z.reshape(z.shape[0], -1)
    h1 = jnp.maximum(x @ w1 + b1, 0.0)
    h2 = jnp.maximum(h1 @ w2 + b2, 0.0)
    out = h2 @ w3 + b3
    return out.reshape(z.shape[0], sequence_length, x_dimension)


if __name__ == "__main__":
    # Small shapes consistent with the module: batch=2, seq=8, z_dim=1, x_dim=1, inter_dim=32
    B, S, ZD, XD, H = 2, 8, 1, 1, 32

    key = jax.random.PRNGKey(0)
    k_z, k_p = jax.random.split(key)
    z = jax.random.normal(k_z, (B, S, ZD), jnp.float32)
    params = init_params(k_p, sequence_length=S, x_dimension=XD, z_dimension=ZD, inter_dim=H)

    mu_x = decoder_mean_forward(
        z, params, sequence_length=S, x_dimension=XD, z_dimension=ZD
    )
    mu_x = jax.block_until_ready(mu_x)

    ref = _reference_forward(z, params, S, XD)
    assert mu_x.shape == (B, S, XD)
    assert jnp.allclose(mu_x, ref, atol=1e-5, rtol=1e-5)

    # Also exercise the multi-tile path (grid > 1, even tile count, batch padding +
    # tail slice) with a batch larger than the max tile size.
    B2 = 9000  # -> n_tiles=4 (forced even), TM=2256, B_p=9024
    z2 = jax.random.normal(jax.random.PRNGKey(1), (B2, S, ZD), jnp.float32)
    mu2 = jax.block_until_ready(
        decoder_mean_forward(z2, params, sequence_length=S, x_dimension=XD, z_dimension=ZD)
    )
    ref2 = _reference_forward(z2, params, S, XD)
    assert mu2.shape == (B2, S, XD)
    assert jnp.allclose(mu2, ref2, atol=1e-4, rtol=1e-4)

    print("KERNEL_OK")
</pallas_src>

<mosaic_0001>
module attributes {stable_mosaic.version = 11 : i64} {
  func.func @_mlp_kernel(%arg0: i32, %arg1: memref<8x8xf32, #tpu.memory_space<vmem>>, %arg2: memref<8x128xf32, #tpu.memory_space<vmem>>, %arg3: memref<1x128xf32, #tpu.memory_space<vmem>>, %arg4: memref<128x128xf32, #tpu.memory_space<vmem>>, %arg5: memref<1x128xf32, #tpu.memory_space<vmem>>, %arg6: memref<128x8xf32, #tpu.memory_space<vmem>>, %arg7: memref<1x8xf32, #tpu.memory_space<vmem>>, %arg8: memref<8x8xf32, #tpu.memory_space<vmem>>) attributes {dimension_semantics = [#tpu.dimension_semantics<parallel>], iteration_bounds = array<i64: 1>, scalar_prefetch = 0 : i64, scratch_operands = 0 : i64, tpu.core_type = #tpu.core_type<tc>, window_params = [{transform_indices = @transform_0, window_bounds = array<i64: 8, 8>}, {pipeline_mode = #tpu.pipeline_mode<synchronous>, transform_indices = @transform_1, window_bounds = array<i64: 8, 128>}, {pipeline_mode = #tpu.pipeline_mode<synchronous>, transform_indices = @transform_2, window_bounds = array<i64: 1, 128>}, {pipeline_mode = #tpu.pipeline_mode<synchronous>, transform_indices = @transform_3, window_bounds = array<i64: 128, 128>}, {pipeline_mode = #tpu.pipeline_mode<synchronous>, transform_indices = @transform_4, window_bounds = array<i64: 1, 128>}, {pipeline_mode = #tpu.pipeline_mode<synchronous>, transform_indices = @transform_5, window_bounds = array<i64: 128, 8>}, {pipeline_mode = #tpu.pipeline_mode<synchronous>, transform_indices = @transform_6, window_bounds = array<i64: 1, 8>}, {transform_indices = @transform_7, window_bounds = array<i64: 8, 8>}]} {
    %c0 = arith.constant 0 : index
    %c0_0 = arith.constant 0 : index
    %0 = vector.load %arg1[%c0, %c0_0] : memref<8x8xf32, #tpu.memory_space<vmem>>, vector<8x8xf32>
    %c0_1 = arith.constant 0 : index
    %c0_2 = arith.constant 0 : index
    %1 = vector.load %arg2[%c0_1, %c0_2] : memref<8x128xf32, #tpu.memory_space<vmem>>, vector<8x128xf32>
    %cst = arith.constant dense<0.000000e+00> : vector<8x128xf32>
    %2 = tpu.matmul %0, %1, %cst {dimension_numbers = #tpu.dot_dimension_numbers<[1], [0], [0], [1], [0, 0, 1, 1], [], []>} : vector<8x8xf32>, vector<8x128xf32>, vector<8x128xf32> -> vector<8x128xf32>
    %c0_3 = arith.constant 0 : index
    %c0_4 = arith.constant 0 : index
    %3 = vector.load %arg3[%c0_3, %c0_4] : memref<1x128xf32, #tpu.memory_space<vmem>>, vector<1x128xf32>
    %4 = vector.broadcast %3 : vector<1x128xf32> to vector<8x128xf32>
    %5 = arith.addf %2, %4 : vector<8x128xf32>
    %cst_5 = arith.constant 0.000000e+00 : f32
    %6 = vector.broadcast %cst_5 : f32 to vector<8x128xf32>
    %7 = arith.maximumf %5, %6 : vector<8x128xf32>
    %c0_6 = arith.constant 0 : index
    %c0_7 = arith.constant 0 : index
    %8 = vector.load %arg4[%c0_6, %c0_7] : memref<128x128xf32, #tpu.memory_space<vmem>>, vector<128x128xf32>
    %cst_8 = arith.constant dense<0.000000e+00> : vector<8x128xf32>
    %9 = tpu.matmul %7, %8, %cst_8 {dimension_numbers = #tpu.dot_dimension_numbers<[1], [0], [0], [1], [0, 0, 1, 1], [], []>} : vector<8x128xf32>, vector<128x128xf32>, vector<8x128xf32> -> vector<8x128xf32>
    %c0_9 = arith.constant 0 : index
    %c0_10 = arith.constant 0 : index
    %10 = vector.load %arg5[%c0_9, %c0_10] : memref<1x128xf32, #tpu.memory_space<vmem>>, vector<1x128xf32>
    %11 = vector.broadcast %10 : vector<1x128xf32> to vector<8x128xf32>
    %12 = arith.addf %9, %11 : vector<8x128xf32>
    %cst_11 = arith.constant 0.000000e+00 : f32
    %13 = vector.broadcast %cst_11 : f32 to vector<8x128xf32>
    %14 = arith.maximumf %12, %13 : vector<8x128xf32>
    %c0_12 = arith.constant 0 : index
    %c0_13 = arith.constant 0 : index
    %15 = vector.load %arg6[%c0_12, %c0_13] : memref<128x8xf32, #tpu.memory_space<vmem>>, vector<128x8xf32>
    %cst_14 = arith.constant dense<0.000000e+00> : vector<8x8xf32>
    %16 = tpu.matmul %14, %15, %cst_14 {dimension_numbers = #tpu.dot_dimension_numbers<[1], [0], [0], [1], [0, 0, 1, 1], [], []>} : vector<8x128xf32>, vector<128x8xf32>, vector<8x8xf32> -> vector<8x8xf32>
    %c0_15 = arith.constant 0 : index
    %c0_16 = arith.constant 0 : index
    %17 = vector.load %arg7[%c0_15, %c0_16] : memref<1x8xf32, #tpu.memory_space<vmem>>, vector<1x8xf32>
    %18 = vector.broadcast %17 : vector<1x8xf32> to vector<8x8xf32>
    %19 = arith.addf %16, %18 : vector<8x8xf32>
    %c0_17 = arith.constant 0 : index
    %c0_18 = arith.constant 0 : index
    %20 = vector.load %arg8[%c0_17, %c0_18] : memref<8x8xf32, #tpu.memory_space<vmem>>, vector<8x8xf32>
    tpu.vector_store %arg8[%c0_17, %c0_18], %19 {strides = array<i32>} : memref<8x8xf32, #tpu.memory_space<vmem>>, vector<8x8xf32>,
    return
  }
  func.func @transform_0(%arg0: i32) -> (i32, i32) {
    %c0_i32 = arith.constant 0 : i32
    %c0_i32_0 = arith.constant 0 : i32
    return %arg0, %c0_i32 : i32, i32
  }
  func.func @transform_1(%arg0: i32) -> (i32, i32) {
    %c0_i32 = arith.constant 0 : i32
    %c0_i32_0 = arith.constant 0 : i32
    %c0_i32_1 = arith.constant 0 : i32
    return %c0_i32, %c0_i32_0 : i32, i32
  }
  func.func @transform_2(%arg0: i32) -> (i32, i32) {
    %c0_i32 = arith.constant 0 : i32
    %c0_i32_0 = arith.constant 0 : i32
    %c0_i32_1 = arith.constant 0 : i32
    return %c0_i32, %c0_i32_0 : i32, i32
  }
  func.func @transform_3(%arg0: i32) -> (i32, i32) {
    %c0_i32 = arith.constant 0 : i32
    %c0_i32_0 = arith.constant 0 : i32
    %c0_i32_1 = arith.constant 0 : i32
    return %c0_i32, %c0_i32_0 : i32, i32
  }
  func.func @transform_4(%arg0: i32) -> (i32, i32) {
    %c0_i32 = arith.constant 0 : i32
    %c0_i32_0 = arith.constant 0 : i32
    %c0_i32_1 = arith.constant 0 : i32
    return %c0_i32, %c0_i32_0 : i32, i32
  }
  func.func @transform_5(%arg0: i32) -> (i32, i32) {
    %c0_i32 = arith.constant 0 : i32
    %c0_i32_0 = arith.constant 0 : i32
    %c0_i32_1 = arith.constant 0 : i32
    return %c0_i32, %c0_i32_0 : i32, i32
  }
  func.func @transform_6(%arg0: i32) -> (i32, i32) {
    %c0_i32 = arith.constant 0 : i32
    %c0_i32_0 = arith.constant 0 : i32
    %c0_i32_1 = arith.constant 0 : i32
    return %c0_i32, %c0_i32_0 : i32, i32
  }
  func.func @transform_7(%arg0: i32) -> (i32, i32) {
    %c0_i32 = arith.constant 0 : i32
    %c0_i32_0 = arith.constant 0 : i32
    return %arg0, %c0_i32 : i32, i32
  }
}

</mosaic_0001>

<llo_original>
// kernel: decoder_mean_forward.1
$region0: #{decoder_mean_forward.1}
  #allocation0 [shape = 'u32[]', space=smem, size = 0x4, offset = 0x4, fixed_abs, tag = 'smem constant byte address 0x4 - core index']
  #allocation1 [shape = 'u32[144,128]{1,0:T(1,128)}', space=vmem, size = 0x12000, scoped, tag = 'internal scratch']
  %s0 = inlined_call_operand.vmem [shape: f32[8,8], index: 0, kind: input, shape index: {}]
  %s1 = inlined_call_operand.vmem [shape: f32[8,128], index: 1, kind: input, shape index: {}]
  %s2 = inlined_call_operand.vmem [shape: f32[1,128], index: 2, kind: input, shape index: {}]
  %s3 = inlined_call_operand.vmem [shape: f32[128,128], index: 3, kind: input, shape index: {}]
  %s4 = inlined_call_operand.vmem [shape: f32[1,128], index: 4, kind: input, shape index: {}]
  %s5 = inlined_call_operand.vmem [shape: f32[128,8], index: 5, kind: input, shape index: {}]
  %s6 = inlined_call_operand.vmem [shape: f32[1,8], index: 6, kind: input, shape index: {}]
  %s7 = inlined_call_operand.vmem [shape: f32[8,8], index: 7, kind: output, shape index: {}]
  %s8 = sld [smem:[#allocation0]]
  $region38: #{decoder_mean_forward.1} parent=0
    _
  %s10 = ssub.s32 1, %s8
  %s11 = scalar_select 0, %s10, %s8
  // Predicated region
  $region2: #{decoder_mean_forward.1} parent=0 // pred_check
    _
  $region3: #{decoder_mean_forward.1} parent=0 // pred_check_branch
    %13 = sbr.rel (0) target = $region5
  $region4: #{decoder_mean_forward.1} parent=0 // pred_region
    _
  $region5: #{decoder_mean_forward.1} parent=0 // pred_fallthru
    _
  // Predicated region
  $region6: #{decoder_mean_forward.1} parent=0 // pred_check
    _
  $region7: #{decoder_mean_forward.1} parent=0 // pred_check_branch
    %15 = sbr.rel (0) target = $region9
  $region8: #{decoder_mean_forward.1} parent=0 // pred_region
    _
  $region9: #{decoder_mean_forward.1} parent=0 // pred_fallthru
    _
  // Predicated region
  $region10: #{decoder_mean_forward.1} parent=0 // pred_check
    _
  $region11: #{decoder_mean_forward.1} parent=0 // pred_check_branch
    %17 = sbr.rel (0) target = $region13
  $region12: #{decoder_mean_forward.1} parent=0 // pred_region
    _
  $region13: #{decoder_mean_forward.1} parent=0 // pred_fallthru
    _
  // Predicated region
  $region14: #{decoder_mean_forward.1} parent=0 // pred_check
    _
  $region15: #{decoder_mean_forward.1} parent=0 // pred_check_branch
    %19 = sbr.rel (0) target = $region17
  $region16: #{decoder_mean_forward.1} parent=0 // pred_region
    _
  $region17: #{decoder_mean_forward.1} parent=0 // pred_fallthru
    _
  // Predicated region
  $region18: #{decoder_mean_forward.1} parent=0 // pred_check
    _
  $region19: #{decoder_mean_forward.1} parent=0 // pred_check_branch
    %21 = sbr.rel (0) target = $region21
  $region20: #{decoder_mean_forward.1} parent=0 // pred_region
    _
  $region21: #{decoder_mean_forward.1} parent=0 // pred_fallthru
    _
  // Predicated region
  $region22: #{decoder_mean_forward.1} parent=0 // pred_check
    _
  $region23: #{decoder_mean_forward.1} parent=0 // pred_check_branch
    %23 = sbr.rel (0) target = $region25
  $region24: #{decoder_mean_forward.1} parent=0 // pred_region
    _
  $region25: #{decoder_mean_forward.1} parent=0 // pred_fallthru
    _
  // Predicated region
  $region26: #{decoder_mean_forward.1} parent=0 // pred_check
    _
  $region27: #{decoder_mean_forward.1} parent=0 // pred_check_branch
    %25 = sbr.rel (0) target = $region29
  $region28: #{decoder_mean_forward.1} parent=0 // pred_region
    _
  $region29: #{decoder_mean_forward.1} parent=0 // pred_fallthru
    _
  %v26 = vld [vmem:[%s0] sm:$0xff]
  %v27 = vld [vmem:[%s1] sm:$0xff]
  %v28 = vld [vmem:[%s2] sm:$0x1]
  %v30 = vlaneseq
  %v31 = vshrl.u32 %v30, 7
  %v32 = vsub.s32 0, %v31
  %v33 = vrot.slane %v28, %v32
  %vm35 = vcmask 64512
  %v37 = vsel %vm35, %v26, 0
  %39 = vmatprep.subr.mxu0 0.0
  %40 = vmatpush1.msra.mxu0 %v27
  %41 = vmatprep.subr.mxu0 0.0
  %42 = vmatpush1.msra.mxu0 0.0
  %43 = vmatprep.subr.mxu0 0.0
  %44 = vmatpush1.msra.mxu0 0.0
  %45 = vmatprep.subr.mxu0 0.0
  %46 = vmatpush1.msra.mxu0 0.0
  %47 = vmatprep.subr.mxu0 0.0
  %48 = vmatpush1.msra.mxu0 0.0
  %49 = vmatprep.subr.mxu0 0.0
  %50 = vmatpush1.msra.mxu0 0.0
  %51 = vmatprep.subr.mxu0 0.0
  %52 = vmatpush1.msra.mxu0 0.0
  %53 = vmatprep.subr.mxu0 0.0
  %54 = vmatpush1.msra.mxu0 0.0
  %55 = vmatprep.subr.mxu0 0.0
  %56 = vmatpush1.msra.mxu0 0.0
  %57 = vmatprep.subr.mxu0 0.0
  %58 = vmatpush1.msra.mxu0 0.0
  %59 = vmatprep.subr.mxu0 0.0
  %60 = vmatpush1.msra.mxu0 0.0
  %61 = vmatprep.subr.mxu0 0.0
  %62 = vmatpush1.msra.mxu0 0.0
  %63 = vmatprep.subr.mxu0 0.0
  %64 = vmatpush1.msra.mxu0 0.0
  %65 = vmatprep.subr.mxu0 0.0
  %66 = vmatpush1.msra.mxu0 0.0
  %67 = vmatprep.subr.mxu0 0.0
  %68 = vmatpush1.msra.mxu0 0.0
  %69 = vmatprep.subr.mxu0 0.0
  %70 = vmatpush1.msra.mxu0 0.0
  %71 = vmatprep.subr.mxu0 0.0
  %72 = vmatpush1.msra.mxu0 0.0
  %73 = vmatprep.subr.mxu0 0.0
  %74 = vmatpush1.msra.mxu0 0.0
  %75 = vmatprep.subr.mxu0 0.0
  %76 = vmatpush1.msra.mxu0 0.0
  %77 = vmatprep.subr.mxu0 0.0
  %78 = vmatpush1.msra.mxu0 0.0
  %79 = vmatprep.subr.mxu0 0.0
  %80 = vmatpush1.msra.mxu0 0.0
  %81 = vmatprep.subr.mxu0 0.0
  %82 = vmatpush1.msra.mxu0 0.0
  %83 = vmatprep.subr.mxu0 0.0
  %84 = vmatpush1.msra.mxu0 0.0
  %85 = vmatprep.subr.mxu0 0.0
  %86 = vmatpush1.msra.mxu0 0.0
  %87 = vmatprep.subr.mxu0 0.0
  %88 = vmatpush1.msra.mxu0 0.0
  %89 = vmatprep.subr.mxu0 0.0
  %90 = vmatpush1.msra.mxu0 0.0
  %91 = vmatprep.subr.mxu0 0.0
  %92 = vmatpush1.msra.mxu0 0.0
  %93 = vmatprep.subr.mxu0 0.0
  %94 = vmatpush1.msra.mxu0 0.0
  %95 = vmatprep.subr.mxu0 0.0
  %96 = vmatpush1.msra.mxu0 0.0
  %97 = vmatprep.subr.mxu0 0.0
  %98 = vmatpush1.msra.mxu0 0.0
  %99 = vmatprep.subr.mxu0 0.0
  %100 = vmatpush1.msra.mxu0 0.0
  %101 = vmatprep.subr.mxu0 0.0
  %102 = vmatpush1.msra.mxu0 0.0
  %103 = vmatprep.mubr.f32.mxu0 0.0
  %104 = vmatmul.mubr.f32.gmra.mrb[0].mxu0 %v37
  %v105 = vpop.f32.mrb[0].mxu0
  %v106 = vadd.f32 %v33, %v105
  %v107 = vpop.f32.mrb[0].mxu0
  %108 = vdwg.mxu0
  %v109 = vmax.f32 %v106, 0.0
  %v110 = vld [vmem:[%s3] sm:$0xff]
  %v111 = vld [vmem:[%s3 + $0x8] sm:$0xff]
  %v112 = vld [vmem:[%s3 + $0x10] sm:$0xff]
  %v113 = vld [vmem:[%s3 + $0x18] sm:$0xff]
  %v114 = vld [vmem:[%s3 + $0x20] sm:$0xff]
  %v115 = vld [vmem:[%s3 + $0x28] sm:$0xff]
  %v116 = vld [vmem:[%s3 + $0x30] sm:$0xff]
  %v117 = vld [vmem:[%s3 + $0x38] sm:$0xff]
  %v118 = vld [vmem:[%s3 + $0x40] sm:$0xff]
  %v119 = vld [vmem:[%s3 + $0x48] sm:$0xff]
  %v120 = vld [vmem:[%s3 + $0x50] sm:$0xff]
  %v121 = vld [vmem:[%s3 + $0x58] sm:$0xff]
  %v122 = vld [vmem:[%s3 + $0x60] sm:$0xff]
  %v123 = vld [vmem:[%s3 + $0x68] sm:$0xff]
  %v124 = vld [vmem:[%s3 + $0x70] sm:$0xff]
  %v125 = vld [vmem:[%s3 + $0x78] sm:$0xff]
  %v126 = vld [vmem:[%s4] sm:$0x1]
  %v128 = vlaneseq
  %v129 = vshrl.u32 %v128, 7
  %v130 = vsub.s32 0, %v129
  %v131 = vrot.slane %v126, %v130
  %133 = vmatprep.subr.mxu0 0.0
  %134 = vmatpush1.msra.mxu0 %v110
  %135 = vmatprep.subr.mxu0 0.0
  %136 = vmatpush1.msra.mxu0 %v111
  %137 = vmatprep.subr.mxu0 0.0
  %138 = vmatpush1.msra.mxu0 %v112
  %139 = vmatprep.subr.mxu0 0.0
  %140 = vmatpush1.msra.mxu0 %v113
  %141 = vmatprep.subr.mxu0 0.0
  %142 = vmatpush1.msra.mxu0 %v114
  %143 = vmatprep.subr.mxu0 0.0
  %144 = vmatpush1.msra.mxu0 %v115
  %145 = vmatprep.subr.mxu0 0.0
  %146 = vmatpush1.msra.mxu0 %v116
  %147 = vmatprep.subr.mxu0 0.0
  %148 = vmatpush1.msra.mxu0 %v117
  %149 = vmatprep.subr.mxu0 0.0
  %150 = vmatpush1.msra.mxu0 %v118
  %151 = vmatprep.subr.mxu0 0.0
  %152 = vmatpush1.msra.mxu0 %v119
  %153 = vmatprep.subr.mxu0 0.0
  %154 = vmatpush1.msra.mxu0 %v120
  %155 = vmatprep.subr.mxu0 0.0
  %156 = vmatpush1.msra.mxu0 %v121
  %157 = vmatprep.subr.mxu0 0.0
  %158 = vmatpush1.msra.mxu0 %v122
  %159 = vmatprep.subr.mxu0 0.0
  %160 = vmatpush1.msra.mxu0 %v123
  %161 = vmatprep.subr.mxu0 0.0
  %162 = vmatpush1.msra.mxu0 %v124
  %163 = vmatprep.subr.mxu0 0.0
  %164 = vmatpush1.msra.mxu0 %v125
  %165 = vmatprep.subr.mxu0 0.0
  %166 = vmatpush1.msra.mxu0 0.0
  %167 = vmatprep.subr.mxu0 0.0
  %168 = vmatpush1.msra.mxu0 0.0
  %169 = vmatprep.subr.mxu0 0.0
  %170 = vmatpush1.msra.mxu0 0.0
  %171 = vmatprep.subr.mxu0 0.0
  %172 = vmatpush1.msra.mxu0 0.0
  %173 = vmatprep.subr.mxu0 0.0
  %174 = vmatpush1.msra.mxu0 0.0
  %175 = vmatprep.subr.mxu0 0.0
  %176 = vmatpush1.msra.mxu0 0.0
  %177 = vmatprep.subr.mxu0 0.0
  %178 = vmatpush1.msra.mxu0 0.0
  %179 = vmatprep.subr.mxu0 0.0
  %180 = vmatpush1.msra.mxu0 0.0
  %181 = vmatprep.subr.mxu0 0.0
  %182 = vmatpush1.msra.mxu0 0.0
  %183 = vmatprep.subr.mxu0 0.0
  %184 = vmatpush1.msra.mxu0 0.0
  %185 = vmatprep.subr.mxu0 0.0
  %186 = vmatpush1.msra.mxu0 0.0
  %187 = vmatprep.subr.mxu0 0.0
  %188 = vmatpush1.msra.mxu0 0.0
  %189 = vmatprep.subr.mxu0 0.0
  %190 = vmatpush1.msra.mxu0 0.0
  %191 = vmatprep.subr.mxu0 0.0
  %192 = vmatpush1.msra.mxu0 0.0
  %193 = vmatprep.subr.mxu0 0.0
  %194 = vmatpush1.msra.mxu0 0.0
  %195 = vmatprep.subr.mxu0 0.0
  %196 = vmatpush1.msra.mxu0 0.0
  %197 = vmatprep.mubr.f32.mxu0 0.0
  %198 = vmatmul.mubr.f32.gmra.mrb[0].mxu0 %v109
  %v199 = vpop.f32.mrb[0].mxu0
  %v200 = vadd.f32 %v131, %v199
  %v201 = vpop.f32.mrb[0].mxu0
  %202 = vdwg.mxu0
  %v203 = vmax.f32 %v200, 0.0
  %v204 = vld [vmem:[%s5] sm:$0xff]
  %v205 = vld [vmem:[%s5 + $0x8] sm:$0xff]
  %v206 = vld [vmem:[%s5 + $0x10] sm:$0xff]
  %v207 = vld [vmem:[%s5 + $0x18] sm:$0xff]
  %v208 = vld [vmem:[%s5 + $0x20] sm:$0xff]
  %v209 = vld [vmem:[%s5 + $0x28] sm:$0xff]
  %v210 = vld [vmem:[%s5 + $0x30] sm:$0xff]
  %v211 = vld [vmem:[%s5 + $0x38] sm:$0xff]
  %v212 = vld [vmem:[%s5 + $0x40] sm:$0xff]
  %v213 = vld [vmem:[%s5 + $0x48] sm:$0xff]
  %v214 = vld [vmem:[%s5 + $0x50] sm:$0xff]
  %v215 = vld [vmem:[%s5 + $0x58] sm:$0xff]
  %v216 = vld [vmem:[%s5 + $0x60] sm:$0xff]
  %v217 = vld [vmem:[%s5 + $0x68] sm:$0xff]
  %v218 = vld [vmem:[%s5 + $0x70] sm:$0xff]
  %v219 = vld [vmem:[%s5 + $0x78] sm:$0xff]
  %v220 = vld [vmem:[%s6] sm:$0x1]
  %v222 = vlaneseq
  %v223 = vshrl.u32 %v222, 7
  %v224 = vsub.s32 0, %v223
  %v225 = vrot.slane %v220, %v224
  %227 = vmatprep.subr.mxu0 0.0
  %228 = vmatpush1.msra.mxu0 %v204
  %229 = vmatprep.subr.mxu0 0.0
  %230 = vmatpush1.msra.mxu0 %v205
  %231 = vmatprep.subr.mxu0 0.0
  %232 = vmatpush1.msra.mxu0 %v206
  %233 = vmatprep.subr.mxu0 0.0
  %234 = vmatpush1.msra.mxu0 %v207
  %235 = vmatprep.subr.mxu0 0.0
  %236 = vmatpush1.msra.mxu0 %v208
  %237 = vmatprep.subr.mxu0 0.0
  %238 = vmatpush1.msra.mxu0 %v209
  %239 = vmatprep.subr.mxu0 0.0
  %240 = vmatpush1.msra.mxu0 %v210
  %241 = vmatprep.subr.mxu0 0.0
  %242 = vmatpush1.msra.mxu0 %v211
  %243 = vmatprep.subr.mxu0 0.0
  %244 = vmatpush1.msra.mxu0 %v212
  %245 = vmatprep.subr.mxu0 0.0
  %246 = vmatpush1.msra.mxu0 %v213
  %247 = vmatprep.subr.mxu0 0.0
  %248 = vmatpush1.msra.mxu0 %v214
  %249 = vmatprep.subr.mxu0 0.0
  %250 = vmatpush1.msra.mxu0 %v215
  %251 = vmatprep.subr.mxu0 0.0
  %252 = vmatpush1.msra.mxu0 %v216
  %253 = vmatprep.subr.mxu0 0.0
  %254 = vmatpush1.msra.mxu0 %v217
  %255 = vmatprep.subr.mxu0 0.0
  %256 = vmatpush1.msra.mxu0 %v218
  %257 = vmatprep.subr.mxu0 0.0
  %258 = vmatpush1.msra.mxu0 %v219
  %259 = vmatprep.subr.mxu0 0.0
  %260 = vmatpush1.msra.mxu0 0.0
  %261 = vmatprep.subr.mxu0 0.0
  %262 = vmatpush1.msra.mxu0 0.0
  %263 = vmatprep.subr.mxu0 0.0
  %264 = vmatpush1.msra.mxu0 0.0
  %265 = vmatprep.subr.mxu0 0.0
  %266 = vmatpush1.msra.mxu0 0.0
  %267 = vmatprep.subr.mxu0 0.0
  %268 = vmatpush1.msra.mxu0 0.0
  %269 = vmatprep.subr.mxu0 0.0
  %270 = vmatpush1.msra.mxu0 0.0
  %271 = vmatprep.subr.mxu0 0.0
  %272 = vmatpush1.msra.mxu0 0.0
  %273 = vmatprep.subr.mxu0 0.0
  %274 = vmatpush1.msra.mxu0 0.0
  %275 = vmatprep.subr.mxu0 0.0
  %276 = vmatpush1.msra.mxu0 0.0
  %277 = vmatprep.subr.mxu0 0.0
  %278 = vmatpush1.msra.mxu0 0.0
  %279 = vmatprep.subr.mxu0 0.0
  %280 = vmatpush1.msra.mxu0 0.0
  %281 = vmatprep.subr.mxu0 0.0
  %282 = vmatpush1.msra.mxu0 0.0
  %283 = vmatprep.subr.mxu0 0.0
  %284 = vmatpush1.msra.mxu0 0.0
  %285 = vmatprep.subr.mxu0 0.0
  %286 = vmatpush1.msra.mxu0 0.0
  %287 = vmatprep.subr.mxu0 0.0
  %288 = vmatpush1.msra.mxu0 0.0
  %289 = vmatprep.subr.mxu0 0.0
  %290 = vmatpush1.msra.mxu0 0.0
  %291 = vmatprep.mubr.f32.mxu0 0.0
  %292 = vmatmul.mubr.f32.gmra.mrb[0].mxu0 %v203
  %v293 = vpop.f32.mrb[0].mxu0
  %v294 = vadd.f32 %v225, %v293
  %v295 = vpop.f32.mrb[0].mxu0
  %296 = vdwg.mxu0
  %297 = vst.msk [vmem:[%s7] sm:$0xff] %vm35, %v294
  // Predicated region
  $region30: #{decoder_mean_forward.1} parent=0 // pred_check
    _
  $region31: #{decoder_mean_forward.1} parent=0 // pred_check_branch
    %299 = sbr.rel (0) target = $region33
  $region32: #{decoder_mean_forward.1} parent=0 // pred_region
    _
  $region33: #{decoder_mean_forward.1} parent=0 // pred_fallthru
    _
  // Predicated region
  $region34: #{decoder_mean_forward.1} parent=0 // pred_check
    _
  $region35: #{decoder_mean_forward.1} parent=0 // pred_check_branch
    %301 = sbr.rel (0) target = $region37
  $region36: #{decoder_mean_forward.1} parent=0 // pred_region
    _
  $region37: #{decoder_mean_forward.1} parent=0 // pred_fallthru
    _

</llo_original>
